<compile_context>
chip_gen: v6e
topology: v6e:2x2x1
jax: 0.10.0
libtpu: 0.0.40
codegen_flags: <defaults>
</compile_context>

<pallas_src>
import jax
import jax.numpy as jnp
from jax.experimental import pallas as pl
from jax.experimental.pallas import tpu as pltpu


def _round_up(x, m):
    return ((x + m - 1) // m) * m


def _vmem_limit_bytes():
    # Per-generation VMEM budget with headroom (~56 MiB on v7x, 100 MiB on v5e/v6e).
    try:
        cap = pltpu.get_tpu_info().vmem_capacity_bytes
    except Exception:
        cap = 64 * 1024 * 1024
    return int(min(cap - 8 * 1024 * 1024, 100 * 1024 * 1024))


def project_node_kernel(h_ref, wp_ref, bp_ref, hv_ref):
    # hv = h @ Wp + bp   (Dropout is identity at inference.)
    hv_ref[...] = (
        jnp.dot(h_ref[...], wp_ref[...], preferred_element_type=jnp.float32)
        + bp_ref[...]
    )


def attentive_gru2_kernel(
    dst_ref,       # (1, Ep)     int32  destination node index per edge (-1 = padded)
    logits_ref,    # (1, Ep)     f32    edge logits (row vector, padded)
    hv_src_ref,    # (Ep, Hp)    bf16   hv[src(e)] gathered per edge (resident)
    h_ref,         # (tV, Fp)    f32    previous node features for this tile (streamed)
    wih_ref,       # (Hp, 3*Fp)  f32    GRU input-to-hidden weight  [r | z | n]
    bih_ref,       # (1, 3*Fp)   f32
    whh_ref,       # (Fp, 3*Fp)  f32    GRU hidden-to-hidden weight [r | z | n]
    bhh_ref,       # (1, 3*Fp)   f32
    out_ref,       # (tV, Fp)    f32    updated node features for this tile
):
    i = pl.program_id(0)
    tv, fp = out_ref.shape
    ep = dst_ref.shape[1]

    # ---- edge softmax in node space: masked row-softmax of a (tV, Ep) slab ----
    node_ids = jax.lax.broadcasted_iota(jnp.int32, (tv, ep), 0) + i * tv
    mask = (node_ids == dst_ref[...]).astype(jnp.float32)          # (tV, Ep) 0/1
    lg = logits_ref[...]                                           # (1, Ep)
    masked = lg + (mask - 1.0) * jnp.float32(1e30)                 # (tV, Ep)
    mx = jnp.max(masked, axis=1, keepdims=True)                    # (tV, 1)
    p = jnp.exp(masked - mx) * mask                                # unnormalized probs
    denom = jnp.sum(p, axis=1, keepdims=True)                      # (tV, 1) f32

    # ---- message passing: c_v = (sum_e p[v,e] * hv[src(e)]) / denom_v ----
    # bf16 operands on the MXU, f32 accumulation; normalization after the matmul in f32.
    c = jnp.dot(p.astype(jnp.bfloat16), hv_src_ref[...],
                preferred_element_type=jnp.float32)                # (tV, Hp)
    c = c * pl.reciprocal(jnp.maximum(denom, 1e-30), approx=True)  # isolated rows -> 0

    # ---- context = ELU(c) ----
    context = jnp.where(c > 0, c, jnp.expm1(jnp.minimum(c, 0.0)))

    # ---- GRUCell(context, h_tile), PyTorch gate order (r, z, n) ----
    h_tile = h_ref[...]                                            # (tV, Fp)
    gi = jnp.dot(context, wih_ref[...],
                 preferred_element_type=jnp.float32) + bih_ref[...]  # (tV, 3*Fp)
    gh = jnp.dot(h_tile, whh_ref[...],
                 preferred_element_type=jnp.float32) + bhh_ref[...]  # (tV, 3*Fp)

    r = jax.nn.sigmoid(gi[:, 0 * fp:1 * fp] + gh[:, 0 * fp:1 * fp])
    z = jax.nn.sigmoid(gi[:, 1 * fp:2 * fp] + gh[:, 1 * fp:2 * fp])
    n = jnp.tanh(gi[:, 2 * fp:3 * fp] + r * gh[:, 2 * fp:3 * fp])
    new_h = (1.0 - z) * n + z * h_tile

    # ---- final ReLU ----
    out_ref[...] = jnp.maximum(new_h, 0.0)


def attentive_gru2(edge_logits, node_feats, src, dst, params, *, tile_v=128):
    """AttentiveGRU2 forward. edge_logits (E,1), node_feats (V,F), src/dst (E,) int32."""
    V, F = node_feats.shape
    E = edge_logits.shape[0]
    H = params["wp"].shape[1]

    fp = _round_up(F, 128)       # lane-dense feature width
    hp = _round_up(H, 128)
    ep = _round_up(E, 128)       # E is the lane dim of the (tV, E) softmax slab
    vp = _round_up(V, tile_v)
    n_tiles = vp // tile_v

    f32, bf16 = jnp.float32, jnp.bfloat16
    vmem_limit = _vmem_limit_bytes()

    # ---- padded operands ----
    h_p = jnp.zeros((vp, fp), f32).at[:V, :F].set(node_feats)
    logits_p = jnp.zeros((1, ep), f32).at[0, :E].set(edge_logits[:, 0])
    dst_p = jnp.full((1, ep), -1, jnp.int32).at[0, :E].set(dst.astype(jnp.int32))

    wp_p = jnp.zeros((fp, hp), f32).at[:F, :H].set(params["wp"])
    bp_p = jnp.zeros((1, hp), f32).at[:, :H].set(params["bp"])

    wih, whh = params["wih"], params["whh"]        # (H, 3F), (F, 3F)
    bih, bhh = params["bih"], params["bhh"]        # (1, 3F)

    def _pack_w(w, rows, rows_pad):
        out = jnp.zeros((rows_pad, 3 * fp), f32)
        out = out.at[:rows, 0 * fp:0 * fp + F].set(w[:, 0 * F:1 * F])   # r
        out = out.at[:rows, 1 * fp:1 * fp + F].set(w[:, 1 * F:2 * F])   # z
        out = out.at[:rows, 2 * fp:2 * fp + F].set(w[:, 2 * F:3 * F])   # n
        return out

    def _pack_b(b):
        out = jnp.zeros((1, 3 * fp), f32)
        out = out.at[:, 0 * fp:0 * fp + F].set(b[:, 0 * F:1 * F])
        out = out.at[:, 1 * fp:1 * fp + F].set(b[:, 1 * F:2 * F])
        out = out.at[:, 2 * fp:2 * fp + F].set(b[:, 2 * F:3 * F])
        return out

    wih_p, whh_p = _pack_w(wih, H, hp), _pack_w(whh, F, fp)
    bih_p, bhh_p = _pack_b(bih), _pack_b(bhh)

    # ---- stage 1: node projection hv = h @ Wp + bp (small, node-tiled, parallel) ----
    hv_p = pl.pallas_call(
        project_node_kernel,
        grid_spec=pltpu.PrefetchScalarGridSpec(
            num_scalar_prefetch=0,
            grid=(n_tiles,),
            in_specs=[
                pl.BlockSpec((tile_v, fp), lambda i: (i, 0)),   # h tile (streamed)
                pl.BlockSpec((fp, hp), lambda i: (0, 0)),       # Wp
                pl.BlockSpec((1, hp), lambda i: (0, 0)),        # bp
            ],
            out_specs=pl.BlockSpec((tile_v, hp), lambda i: (i, 0)),
        ),
        out_shape=jax.ShapeDtypeStruct((vp, hp), f32),
        compiler_params=pltpu.CompilerParams(
            dimension_semantics=("parallel",),
            vmem_limit_bytes=vmem_limit,
        ),
    )(h_p, wp_p, bp_p)

    # Per-edge gather of source-node features (plain XLA gather; padded edges never
    # contribute because their softmax mass is exactly zero).
    hv_src_p = jnp.zeros((ep, hp), bf16).at[:E, :].set(hv_p[src].astype(bf16))

    # ---- stage 2: edge softmax + message passing + GRU, tiled over nodes ----
    grid_spec = pltpu.PrefetchScalarGridSpec(
        num_scalar_prefetch=0,
        grid=(n_tiles,),
        in_specs=[
            pl.BlockSpec((1, ep), lambda i: (0, 0)),             # dst indices (resident)
            pl.BlockSpec((1, ep), lambda i: (0, 0)),             # logits      (resident)
            pl.BlockSpec((ep, hp), lambda i: (0, 0)),            # hv[src]     (resident)
            pl.BlockSpec((tile_v, fp), lambda i: (i, 0)),        # h tile      (streamed)
            pl.BlockSpec((hp, 3 * fp), lambda i: (0, 0)),        # Wih
            pl.BlockSpec((1, 3 * fp), lambda i: (0, 0)),         # bih
            pl.BlockSpec((fp, 3 * fp), lambda i: (0, 0)),        # Whh
            pl.BlockSpec((1, 3 * fp), lambda i: (0, 0)),         # bhh
        ],
        out_specs=pl.BlockSpec((tile_v, fp), lambda i: (i, 0)),
    )

    out_p = pl.pallas_call(
        attentive_gru2_kernel,
        grid_spec=grid_spec,
        out_shape=jax.ShapeDtypeStruct((vp, fp), jnp.float32),
        compiler_params=pltpu.CompilerParams(
            # No cross-step state: node tiles are independent -> shard across TCs.
            dimension_semantics=("parallel",),
            vmem_limit_bytes=vmem_limit,
        ),
    )(dst_p, logits_p, hv_src_p, h_p, wih_p, bih_p, whh_p, bhh_p)

    return out_p[:V, :F]


def reference(edge_logits, node_feats, src, dst, params, V):
    """Pure-JAX reference mirroring the PyTorch/DGL semantics (f32 throughout)."""
    lg = edge_logits[:, 0]
    mx = jax.ops.segment_max(lg, dst, num_segments=V)
    ex = jnp.exp(lg - mx[dst])
    dn = jax.ops.segment_sum(ex, dst, num_segments=V)
    a = (ex / dn[dst])[:, None]
    hv = node_feats @ params["wp"] + params["bp"][0]
    m = a * hv[src]
    c = jax.ops.segment_sum(m, dst, num_segments=V)
    context = jax.nn.elu(c)
    gi = context @ params["wih"] + params["bih"][0]
    gh = node_feats @ params["whh"] + params["bhh"][0]
    F = node_feats.shape[1]
    r = jax.nn.sigmoid(gi[:, :F] + gh[:, :F])
    z = jax.nn.sigmoid(gi[:, F:2 * F] + gh[:, F:2 * F])
    n = jnp.tanh(gi[:, 2 * F:] + r * gh[:, 2 * F:])
    new_h = (1.0 - z) * n + z * node_feats
    return jnp.maximum(new_h, 0.0)


if __name__ == "__main__":
    # Small synthetic problem: V nodes, E edges, node_feat_size F, edge_hidden_size H.
    V, E = 24, 48
    F, H = 32, 32

    key = jax.random.PRNGKey(0)
    k = jax.random.split(key, 8)

    edge_logits = jax.random.normal(k[0], (E, 1), dtype=jnp.float32)
    node_feats = jax.random.normal(k[1], (V, F), dtype=jnp.float32)

    # Deterministic graph; node V-1 has zero incoming edges so the isolated-node
    # zero-mass path of the node-space softmax is exercised.
    src = (jnp.arange(E, dtype=jnp.int32) * 5 + 2) % V
    dst = jnp.arange(E, dtype=jnp.int32) % (V - 1)

    s = 0.1
    params = {
        "wp":  s * jax.random.normal(k[2], (F, H), dtype=jnp.float32),
        "bp":  s * jax.random.normal(k[3], (1, H), dtype=jnp.float32),
        "wih": s * jax.random.normal(k[4], (H, 3 * F), dtype=jnp.float32),
        "bih": s * jax.random.normal(k[5], (1, 3 * F), dtype=jnp.float32),
        "whh": s * jax.random.normal(k[6], (F, 3 * F), dtype=jnp.float32),
        "bhh": s * jax.random.normal(k[7], (1, 3 * F), dtype=jnp.float32),
    }

    out = attentive_gru2(edge_logits, node_feats, src, dst, params, tile_v=128)
    out = jax.block_until_ready(out)

    ref = reference(edge_logits, node_feats, src, dst, params, V)
    assert out.shape == (V, F)
    # The attention-weighted gather runs on the MXU in bfloat16 (f32 accumulation),
    # so compare with a bf16-appropriate tolerance.
    err = jnp.max(jnp.abs(out - ref))
    assert jnp.allclose(out, ref, atol=5e-2, rtol=5e-2), f"max abs err {err}"
    print("KERNEL_OK")
</pallas_src>

<mosaic_0001>
module attributes {stable_mosaic.version = 11 : i64} {
  func.func @project_node_kernel(%arg0: i32, %arg1: memref<128x128xf32, #tpu.memory_space<vmem>>, %arg2: memref<128x128xf32, #tpu.memory_space<vmem>>, %arg3: memref<1x128xf32, #tpu.memory_space<vmem>>, %arg4: memref<128x128xf32, #tpu.memory_space<vmem>>) attributes {dimension_semantics = [#tpu.dimension_semantics<parallel>], iteration_bounds = array<i64: 1>, scalar_prefetch = 0 : i64, scratch_operands = 0 : i64, tpu.core_type = #tpu.core_type<tc>, window_params = [{transform_indices = @transform_0, window_bounds = array<i64: 128, 128>}, {pipeline_mode = #tpu.pipeline_mode<synchronous>, transform_indices = @transform_1, window_bounds = array<i64: 128, 128>}, {pipeline_mode = #tpu.pipeline_mode<synchronous>, transform_indices = @transform_2, window_bounds = array<i64: 1, 128>}, {transform_indices = @transform_3, window_bounds = array<i64: 128, 128>}]} {
    %c0 = arith.constant 0 : index
    %c0_0 = arith.constant 0 : index
    %0 = vector.load %arg1[%c0, %c0_0] : memref<128x128xf32, #tpu.memory_space<vmem>>, vector<128x128xf32>
    %c0_1 = arith.constant 0 : index
    %c0_2 = arith.constant 0 : index
    %1 = vector.load %arg2[%c0_1, %c0_2] : memref<128x128xf32, #tpu.memory_space<vmem>>, vector<128x128xf32>
    %cst = arith.constant dense<0.000000e+00> : vector<128x128xf32>
    %2 = tpu.matmul %0, %1, %cst {dimension_numbers = #tpu.dot_dimension_numbers<[1], [0], [0], [1], [0, 0, 1, 1], [], []>} : vector<128x128xf32>, vector<128x128xf32>, vector<128x128xf32> -> vector<128x128xf32>
    %c0_3 = arith.constant 0 : index
    %c0_4 = arith.constant 0 : index
    %3 = vector.load %arg3[%c0_3, %c0_4] : memref<1x128xf32, #tpu.memory_space<vmem>>, vector<1x128xf32>
    %4 = vector.broadcast %3 : vector<1x128xf32> to vector<128x128xf32>
    %5 = arith.addf %2, %4 : vector<128x128xf32>
    %c0_5 = arith.constant 0 : index
    %c0_6 = arith.constant 0 : index
    %6 = vector.load %arg4[%c0_5, %c0_6] : memref<128x128xf32, #tpu.memory_space<vmem>>, vector<128x128xf32>
    tpu.vector_store %arg4[%c0_5, %c0_6], %5 {strides = array<i32>} : memref<128x128xf32, #tpu.memory_space<vmem>>, vector<128x128xf32>,
    return
  }
  func.func @transform_0(%arg0: i32) -> (i32, i32) {
    %c0_i32 = arith.constant 0 : i32
    %c0_i32_0 = arith.constant 0 : i32
    return %arg0, %c0_i32 : i32, i32
  }
  func.func @transform_1(%arg0: i32) -> (i32, i32) {
    %c0_i32 = arith.constant 0 : i32
    %c0_i32_0 = arith.constant 0 : i32
    %c0_i32_1 = arith.constant 0 : i32
    return %c0_i32, %c0_i32_0 : i32, i32
  }
  func.func @transform_2(%arg0: i32) -> (i32, i32) {
    %c0_i32 = arith.constant 0 : i32
    %c0_i32_0 = arith.constant 0 : i32
    %c0_i32_1 = arith.constant 0 : i32
    return %c0_i32, %c0_i32_0 : i32, i32
  }
  func.func @transform_3(%arg0: i32) -> (i32, i32) {
    %c0_i32 = arith.constant 0 : i32
    %c0_i32_0 = arith.constant 0 : i32
    return %arg0, %c0_i32 : i32, i32
  }
}

</mosaic_0001>

<llo_original>
// kernel: tpu_custom_call.1
$region0: #{tpu_custom_call.1}
  #allocation0 [shape = 'u32[]', space=smem, size = 0x4, offset = 0x4, fixed_abs, tag = 'smem constant byte address 0x4 - core index']
  #allocation1 [shape = 'u32[144,128]{1,0:T(1,128)}', space=vmem, size = 0x12000, scoped, tag = 'internal scratch']
  %s0 = inlined_call_operand.hbm [shape: f32[128,128], index: 0, kind: input, shape index: {}]
  %s1 = inlined_call_operand.hbm [shape: f32[128,128], index: 1, kind: input, shape index: {}]
  %s2 = inlined_call_operand.vmem [shape: f32[1,128], index: 2, kind: input, shape index: {}]
  %s3 = inlined_call_operand.hbm [shape: f32[128,128], index: 3, kind: output, shape index: {}]
  %s4 = sld [smem:[#allocation0]]
  $region30: #{tpu_custom_call.1} parent=0
    _
  %s6 = ssub.s32 1, %s4
  %s7 = scalar_select 0, %s6, %s4
  $region1: #{tpu_custom_call.1} parent=0
    #allocation2 [shape = 'u8[65536]{0}', space=vmem, size = 0x10000, scoped, tag = 'input window, operand 0, single buffered']
    #allocation3 [shape = 's32[1]{0}', space=sflag, size = 0x4, scoped, tag = 'scoped memory for tpu_custom_call.1']
    #allocation4 [shape = 's32[1]{0}', space=sflag, size = 0x4, scoped, tag = 'scoped memory for tpu_custom_call.1']
    #allocation5 [shape = 'u8[65536]{0}', space=vmem, size = 0x10000, scoped, tag = 'input window, operand 1, single buffered']
    #allocation6 [shape = 's32[1]{0}', space=sflag, size = 0x4, scoped, tag = 'scoped memory for tpu_custom_call.1']
    #allocation7 [shape = 'u8[65536]{0}', space=vmem, size = 0x10000, scoped, tag = 'output window, operand 0, single buffered']
    %8 = vsyncpa [#allocation3], 0
    %9 = vsyncpa [#allocation6], 0
    %10 = vsyncpa [#allocation4], 0
    // Predicated region
    $region2: #{tpu_custom_call.1} parent=1 // pred_check
      _
    $region3: #{tpu_custom_call.1} parent=1 // pred_check_branch
      %12 = sbr.rel (0) target = $region5
    $region4: #{tpu_custom_call.1} parent=1 // pred_region
      %s14 = ssub.s32 2048, 2048
      %15 = vsyncadd [#allocation3], %s14
      %s16 = sshll.u32 [#allocation2], 4
      %s17 = int_to_ptr.vmem [resolvable:$true] %s16
      %22 = dma.hbm_to_vmem [thread:$0]  %s0, 2048, %s17, [#allocation3], 128, 128, 8
    $region5: #{tpu_custom_call.1} parent=1 // pred_fallthru
      _
    // Predicated region
    $region6: #{tpu_custom_call.1} parent=1 // pred_check
      _
    $region7: #{tpu_custom_call.1} parent=1 // pred_check_branch
      %24 = sbr.rel (0) target = $region9
    $region8: #{tpu_custom_call.1} parent=1 // pred_region
      %s26 = ssub.s32 2048, 2048
      %27 = vsyncadd [#allocation6], %s26
      %s28 = sshll.u32 [#allocation5], 4
      %s29 = int_to_ptr.vmem [resolvable:$true] %s28
      %34 = dma.hbm_to_vmem [thread:$0]  %s1, 2048, %s29, [#allocation6], 128, 128, 8
    $region9: #{tpu_custom_call.1} parent=1 // pred_fallthru
      _
    // Predicated region
    $region10: #{tpu_custom_call.1} parent=1 // pred_check
      _
    $region11: #{tpu_custom_call.1} parent=1 // pred_check_branch
      %36 = sbr.rel (0) target = $region13
    $region12: #{tpu_custom_call.1} parent=1 // pred_region
      _
    $region13: #{tpu_custom_call.1} parent=1 // pred_fallthru
      _
    // Predicated region
    $region14: #{tpu_custom_call.1} parent=1 // pred_check
      _
    $region15: #{tpu_custom_call.1} parent=1 // pred_check_branch
      %38 = sbr.rel (0) target = $region17
    $region16: #{tpu_custom_call.1} parent=1 // pred_region
      %39 = dma.done [#allocation3], 2048
    $region17: #{tpu_custom_call.1} parent=1 // pred_fallthru
      _
    // Predicated region
    $region18: #{tpu_custom_call.1} parent=1 // pred_check
      _
    $region19: #{tpu_custom_call.1} parent=1 // pred_check_branch
      %41 = sbr.rel (0) target = $region21
    $region20: #{tpu_custom_call.1} parent=1 // pred_region
      %42 = dma.done [#allocation6], 2048
    $region21: #{tpu_custom_call.1} parent=1 // pred_fallthru
      _
    %v43 = vld [vmem:[#allocation2] sm:$0xff]
    %v44 = vld [vmem:[#allocation2 + $0x8] sm:$0xff]
    %v45 = vld [vmem:[#allocation2 + $0x10] sm:$0xff]
    %v46 = vld [vmem:[#allocation2 + $0x18] sm:$0xff]
    %v47 = vld [vmem:[#allocation2 + $0x20] sm:$0xff]
    %v48 = vld [vmem:[#allocation2 + $0x28] sm:$0xff]
    %v49 = vld [vmem:[#allocation2 + $0x30] sm:$0xff]
    %v50 = vld [vmem:[#allocation2 + $0x38] sm:$0xff]
    %v51 = vld [vmem:[#allocation2 + $0x40] sm:$0xff]
    %v52 = vld [vmem:[#allocation2 + $0x48] sm:$0xff]
    %v53 = vld [vmem:[#allocation2 + $0x50] sm:$0xff]
    %v54 = vld [vmem:[#allocation2 + $0x58] sm:$0xff]
    %v55 = vld [vmem:[#allocation2 + $0x60] sm:$0xff]
    %v56 = vld [vmem:[#allocation2 + $0x68] sm:$0xff]
    %v57 = vld [vmem:[#allocation2 + $0x70] sm:$0xff]
    %v58 = vld [vmem:[#allocation2 + $0x78] sm:$0xff]
    %v59 = vld [vmem:[#allocation5] sm:$0xff]
    %v60 = vld [vmem:[#allocation5 + $0x8] sm:$0xff]
    %v61 = vld [vmem:[#allocation5 + $0x10] sm:$0xff]
    %v62 = vld [vmem:[#allocation5 + $0x18] sm:$0xff]
    %v63 = vld [vmem:[#allocation5 + $0x20] sm:$0xff]
    %v64 = vld [vmem:[#allocation5 + $0x28] sm:$0xff]
    %v65 = vld [vmem:[#allocation5 + $0x30] sm:$0xff]
    %v66 = vld [vmem:[#allocation5 + $0x38] sm:$0xff]
    %v67 = vld [vmem:[#allocation5 + $0x40] sm:$0xff]
    %v68 = vld [vmem:[#allocation5 + $0x48] sm:$0xff]
    %v69 = vld [vmem:[#allocation5 + $0x50] sm:$0xff]
    %v70 = vld [vmem:[#allocation5 + $0x58] sm:$0xff]
    %v71 = vld [vmem:[#allocation5 + $0x60] sm:$0xff]
    %v72 = vld [vmem:[#allocation5 + $0x68] sm:$0xff]
    %v73 = vld [vmem:[#allocation5 + $0x70] sm:$0xff]
    %v74 = vld [vmem:[#allocation5 + $0x78] sm:$0xff]
    %v75 = vld [vmem:[%s2] sm:$0x1]
    %v77 = vlaneseq
    %v78 = vshrl.u32 %v77, 7
    %v79 = vsub.s32 0, %v78
    %v80 = vrot.slane %v75, %v79
    %82 = vmatprep.subr.mxu0 0.0
    %83 = vmatpush1.msra.mxu0 %v74
    %84 = vmatprep.subr.mxu0 0.0
    %85 = vmatpush1.msra.mxu0 %v73
    %86 = vmatprep.subr.mxu0 0.0
    %87 = vmatpush1.msra.mxu0 %v72
    %88 = vmatprep.subr.mxu0 0.0
    %89 = vmatpush1.msra.mxu0 %v71
    %90 = vmatprep.subr.mxu0 0.0
    %91 = vmatpush1.msra.mxu0 %v70
    %92 = vmatprep.subr.mxu0 0.0
    %93 = vmatpush1.msra.mxu0 %v69
    %94 = vmatprep.subr.mxu0 0.0
    %95 = vmatpush1.msra.mxu0 %v68
    %96 = vmatprep.subr.mxu0 0.0
    %97 = vmatpush1.msra.mxu0 %v67
    %98 = vmatprep.subr.mxu0 0.0
    %99 = vmatpush1.msra.mxu0 %v66
    %100 = vmatprep.subr.mxu0 0.0
    %101 = vmatpush1.msra.mxu0 %v65
    %102 = vmatprep.subr.mxu0 0.0
    %103 = vmatpush1.msra.mxu0 %v64
    %104 = vmatprep.subr.mxu0 0.0
    %105 = vmatpush1.msra.mxu0 %v63
    %106 = vmatprep.subr.mxu0 0.0
    %107 = vmatpush1.msra.mxu0 %v62
    %108 = vmatprep.subr.mxu0 0.0
    %109 = vmatpush1.msra.mxu0 %v61
    %110 = vmatprep.subr.mxu0 0.0
    %111 = vmatpush1.msra.mxu0 %v60
    %112 = vmatprep.subr.mxu0 0.0
    %113 = vmatpush1.msra.mxu0 %v59
    %114 = vmatprep.subr.mxu0 0.0
    %115 = vmatpush2.msra.mxu0 0.0
    %116 = vmatprep.subr.mxu0 0.0
    %117 = vmatpush2.msra.mxu0 0.0
    %118 = vmatprep.subr.mxu0 0.0
    %119 = vmatpush2.msra.mxu0 0.0
    %120 = vmatprep.subr.mxu0 0.0
    %121 = vmatpush2.msra.mxu0 0.0
    %122 = vmatprep.subr.mxu0 0.0
    %123 = vmatpush2.msra.mxu0 0.0
    %124 = vmatprep.subr.mxu0 0.0
    %125 = vmatpush2.msra.mxu0 0.0
    %126 = vmatprep.subr.mxu0 0.0
    %127 = vmatpush2.msra.mxu0 0.0
    %128 = vmatprep.subr.mxu0 0.0
    %129 = vmatpush2.msra.mxu0 0.0
    %130 = vmatprep.subr.mxu0 0.0
    %131 = vmatpush2.msra.mxu0 0.0
    %132 = vmatprep.subr.mxu0 0.0
    %133 = vmatpush2.msra.mxu0 0.0
    %134 = vmatprep.subr.mxu0 0.0
    %135 = vmatpush2.msra.mxu0 0.0
    %136 = vmatprep.subr.mxu0 0.0
    %137 = vmatpush2.msra.mxu0 0.0
    %138 = vmatprep.subr.mxu0 0.0
    %139 = vmatpush2.msra.mxu0 0.0
    %140 = vmatprep.subr.mxu0 0.0
    %141 = vmatpush2.msra.mxu0 0.0
    %142 = vmatprep.subr.mxu0 0.0
    %143 = vmatpush2.msra.mxu0 0.0
    %144 = vmatprep.subr.mxu0 0.0
    %145 = vmatpush2.msra.mxu0 0.0
    %146 = vmatprep.mubr.f32.mxu0 0.0
    %147 = vmatmul.mubr.f32.gmra.mxu0 %v43
    %v148 = vpop.f32.mrf.mxu0
    %v149 = vadd.f32 %v80, %v148
    %v150 = vpop.f32.mrf.mxu0
    %151 = vmatprep.mubr.f32.mxu0 0.0
    %152 = vmatmul.mubr.f32.gmra.mxu0 %v44
    %v153 = vpop.f32.mrf.mxu0
    %v154 = vadd.f32 %v80, %v153
    %v155 = vpop.f32.mrf.mxu0
    %156 = vmatprep.mubr.f32.mxu0 0.0
    %157 = vmatmul.mubr.f32.gmra.mxu0 %v45
    %v158 = vpop.f32.mrf.mxu0
    %v159 = vadd.f32 %v80, %v158
    %v160 = vpop.f32.mrf.mxu0
    %161 = vmatprep.mubr.f32.mxu0 0.0
    %162 = vmatmul.mubr.f32.gmra.mxu0 %v46
    %v163 = vpop.f32.mrf.mxu0
    %v164 = vadd.f32 %v80, %v163
    %v165 = vpop.f32.mrf.mxu0
    %166 = vmatprep.mubr.f32.mxu0 0.0
    %167 = vmatmul.mubr.f32.gmra.mxu0 %v47
    %v168 = vpop.f32.mrf.mxu0
    %v169 = vadd.f32 %v80, %v168
    %v170 = vpop.f32.mrf.mxu0
    %171 = vmatprep.mubr.f32.mxu0 0.0
    %172 = vmatmul.mubr.f32.gmra.mxu0 %v48
    %v173 = vpop.f32.mrf.mxu0
    %v174 = vadd.f32 %v80, %v173
    %v175 = vpop.f32.mrf.mxu0
    %176 = vmatprep.mubr.f32.mxu0 0.0
    %177 = vmatmul.mubr.f32.gmra.mxu0 %v49
    %v178 = vpop.f32.mrf.mxu0
    %v179 = vadd.f32 %v80, %v178
    %v180 = vpop.f32.mrf.mxu0
    %181 = vmatprep.mubr.f32.mxu0 0.0
    %182 = vmatmul.mubr.f32.gmra.mxu0 %v50
    %v183 = vpop.f32.mrf.mxu0
    %v184 = vadd.f32 %v80, %v183
    %v185 = vpop.f32.mrf.mxu0
    %186 = vmatprep.mubr.f32.mxu0 0.0
    %187 = vmatmul.mubr.f32.gmra.mxu0 %v51
    %v188 = vpop.f32.mrf.mxu0
    %v189 = vadd.f32 %v80, %v188
    %v190 = vpop.f32.mrf.mxu0
    %191 = vmatprep.mubr.f32.mxu0 0.0
    %192 = vmatmul.mubr.f32.gmra.mxu0 %v52
    %v193 = vpop.f32.mrf.mxu0
    %v194 = vadd.f32 %v80, %v193
    %v195 = vpop.f32.mrf.mxu0
    %196 = vmatprep.mubr.f32.mxu0 0.0
    %197 = vmatmul.mubr.f32.gmra.mxu0 %v53
    %v198 = vpop.f32.mrf.mxu0
    %v199 = vadd.f32 %v80, %v198
    %v200 = vpop.f32.mrf.mxu0
    %201 = vmatprep.mubr.f32.mxu0 0.0
    %202 = vmatmul.mubr.f32.gmra.mxu0 %v54
    %v203 = vpop.f32.mrf.mxu0
    %v204 = vadd.f32 %v80, %v203
    %v205 = vpop.f32.mrf.mxu0
    %206 = vmatprep.mubr.f32.mxu0 0.0
    %207 = vmatmul.mubr.f32.gmra.mxu0 %v55
    %v208 = vpop.f32.mrf.mxu0
    %v209 = vadd.f32 %v80, %v208
    %v210 = vpop.f32.mrf.mxu0
    %211 = vmatprep.mubr.f32.mxu0 0.0
    %212 = vmatmul.mubr.f32.gmra.mxu0 %v56
    %v213 = vpop.f32.mrf.mxu0
    %v214 = vadd.f32 %v80, %v213
    %v215 = vpop.f32.mrf.mxu0
    %216 = vmatprep.mubr.f32.mxu0 0.0
    %217 = vmatmul.mubr.f32.gmra.mxu0 %v57
    %v218 = vpop.f32.mrf.mxu0
    %v219 = vadd.f32 %v80, %v218
    %v220 = vpop.f32.mrf.mxu0
    %221 = vmatprep.mubr.f32.mxu0 0.0
    %222 = vmatmul.mubr.f32.gmra.mxu0 %v58
    %v223 = vpop.f32.mrf.mxu0
    %v224 = vadd.f32 %v80, %v223
    %v225 = vpop.f32.mrf.mxu0
    %226 = vdwg.mxu0
    %227 = vst [vmem:[#allocation7] sm:$0xff] %v149
    %228 = vst [vmem:[#allocation7 + $0x8] sm:$0xff] %v154
    %229 = vst [vmem:[#allocation7 + $0x10] sm:$0xff] %v159
    %230 = vst [vmem:[#allocation7 + $0x18] sm:$0xff] %v164
    %231 = vst [vmem:[#allocation7 + $0x20] sm:$0xff] %v169
    %232 = vst [vmem:[#allocation7 + $0x28] sm:$0xff] %v174
    %233 = vst [vmem:[#allocation7 + $0x30] sm:$0xff] %v179
    %234 = vst [vmem:[#allocation7 + $0x38] sm:$0xff] %v184
    %235 = vst [vmem:[#allocation7 + $0x40] sm:$0xff] %v189
    %236 = vst [vmem:[#allocation7 + $0x48] sm:$0xff] %v194
    %237 = vst [vmem:[#allocation7 + $0x50] sm:$0xff] %v199
    %238 = vst [vmem:[#allocation7 + $0x58] sm:$0xff] %v204
    %239 = vst [vmem:[#allocation7 + $0x60] sm:$0xff] %v209
    %240 = vst [vmem:[#allocation7 + $0x68] sm:$0xff] %v214
    %241 = vst [vmem:[#allocation7 + $0x70] sm:$0xff] %v219
    %242 = vst [vmem:[#allocation7 + $0x78] sm:$0xff] %v224
    // Predicated region
    $region22: #{tpu_custom_call.1} parent=1 // pred_check
      _
    $region23: #{tpu_custom_call.1} parent=1 // pred_check_branch
      %244 = sbr.rel (0) target = $region25
    $region24: #{tpu_custom_call.1} parent=1 // pred_region
      %s246 = ssub.s32 2048, 2048
      %247 = vsyncadd [#allocation4], %s246
      %s248 = sshll.u32 [#allocation7], 4
      %s249 = int_to_ptr.vmem [resolvable:$true] %s248
      %254 = dma.vmem_to_hbm [thread:$0]  %s249, 2048, %s3, [#allocation4], 128, 128, 8
    $region25: #{tpu_custom_call.1} parent=1 // pred_fallthru
      _
    // Predicated region
    $region26: #{tpu_custom_call.1} parent=1 // pred_check
      _
    $region27: #{tpu_custom_call.1} parent=1 // pred_check_branch
      %256 = sbr.rel (0) target = $region29
    $region28: #{tpu_custom_call.1} parent=1 // pred_region
      %257 = dma.done [#allocation4], 2048
    $region29: #{tpu_custom_call.1} parent=1 // pred_fallthru
      _
    %258 = vsyncpa [#allocation3], 1
    %259 = vsyncpa [#allocation6], 1
    %260 = vsyncpa [#allocation4], 1

</llo_original>
